<compile_context>
chip_gen: v7x
topology: tpu7x:2x2x1
jax: 0.10.0
libtpu: 0.0.40
codegen_flags: <defaults>
</compile_context>

<pallas_src>
import jax
import jax.numpy as jnp
from jax.experimental import pallas as pl
from jax.experimental.pallas import tpu as pltpu

EPS = 1e-6
MAX_TILE = 16384   # lanes per grid step (HBM-bound: go big; fits VMEM easily for C<=6)


def _make_dice_kernel(n_main, hw, tile, with_max):
    """Fused dice-sum kernel. Per grid step (n, j):
         pred_ref : (Cp, tile)   pred[n, :, j*tile:(j+1)*tile]
         gt_ref   : (Cg, tile)
         mask_ref : (1,  tile)
         out_ref  : (1, 1)       written once at the last grid step
         scratch  : 3 lane-resident f32 accumulators (n_main, tile)
                    (+3 of (1, tile) when with_max).
    """
    tail = (hw % tile) != 0

    def kernel(pred_ref, gt_ref, mask_ref, out_ref, *acc):
        i_acc, pm_acc, gm_acc = acc[0], acc[1], acc[2]
        if with_max:
            xi_acc, xp_acc, xg_acc = acc[3], acc[4], acc[5]

        n = pl.program_id(0)
        j = pl.program_id(1)
        first = jnp.logical_and(n == 0, j == 0)
        last = jnp.logical_and(n == pl.num_programs(0) - 1,
                               j == pl.num_programs(1) - 1)

        @pl.when(first)
        def _():
            i_acc[...] = jnp.zeros_like(i_acc)
            pm_acc[...] = jnp.zeros_like(pm_acc)
            gm_acc[...] = jnp.zeros_like(gm_acc)
            if with_max:
                xi_acc[...] = jnp.zeros_like(xi_acc)
                xp_acc[...] = jnp.zeros_like(xp_acc)
                xg_acc[...] = jnp.zeros_like(xg_acc)

        # ingest in native dtype (bf16 stays bf16 in HBM), compute in f32
        p = pred_ref[...].astype(jnp.float32)   # (Cp, tile)
        g = gt_ref[...].astype(jnp.float32)     # (Cg, tile)
        m = mask_ref[...].astype(jnp.float32)   # (1,  tile)

        if tail:
            # zero lanes past H*W (padded block region is undefined memory)
            lane = jax.lax.broadcasted_iota(jnp.int32, (1, tile), 1)
            valid = (j * tile + lane) < hw
            p = jnp.where(valid, p, 0.0)
            g = jnp.where(valid, g, 0.0)
            m = jnp.where(valid, m, 0.0)

        p_main = p[:n_main]
        gm = g[:n_main] * m                     # reused g*m product
        i_acc[...] += p_main * gm
        pm_acc[...] += p_main * m
        gm_acc[...] += gm

        if with_max:
            gp = jnp.max(p, axis=0, keepdims=True)   # max over ALL pred channels
            ggm = g[n_main:n_main + 1] * m
            xi_acc[...] += gp * ggm
            xp_acc[...] += gp * m
            xg_acc[...] += ggm

        @pl.when(last)
        def _():
            inter = jnp.sum(i_acc[...], axis=1, keepdims=True)          # (n_main, 1)
            union = (jnp.sum(pm_acc[...], axis=1, keepdims=True)
                     + jnp.sum(gm_acc[...], axis=1, keepdims=True) + EPS)
            total = jnp.sum(1.0 - 2.0 * inter / union, keepdims=True)   # (1, 1)
            if with_max:
                xi = jnp.sum(xi_acc[...], keepdims=True)
                xu = (jnp.sum(xp_acc[...], keepdims=True)
                      + jnp.sum(xg_acc[...], keepdims=True) + EPS)
                total = total + (1.0 - 2.0 * xi / xu)
            out_ref[...] = total

    return kernel


def _round_up(x, m):
    return ((x + m - 1) // m) * m


def _fused_dice_sum(pred_ncl, gt_ncl, mask_n1l, n_main, with_max=False):
    """pred_ncl: (N, Cp, L); gt_ncl: (N, Cg, L); mask_n1l: (N, 1, L).
    Returns  sum_{c < n_main} dice(pred[:, c], gt[:, c], mask)
             (+ dice(max_c pred[:, c], gt[:, n_main], mask) if with_max)."""
    N, n_pred, L = pred_ncl.shape
    _, n_gt, _ = gt_ncl.shape
    tile = min(MAX_TILE, _round_up(L, 128))
    num_tiles = pl.cdiv(L, tile)

    kernel = _make_dice_kernel(n_main=n_main, hw=L, tile=tile, with_max=with_max)
    scratch = [pltpu.VMEM((n_main, tile), jnp.float32)] * 3
    if with_max:
        scratch = scratch + [pltpu.VMEM((1, tile), jnp.float32)] * 3

    out = pl.pallas_call(
        kernel,
        out_shape=jax.ShapeDtypeStruct((1, 1), jnp.float32),
        grid_spec=pltpu.PrefetchScalarGridSpec(
            num_scalar_prefetch=0,
            grid=(N, num_tiles),
            in_specs=[
                pl.BlockSpec((pl.Squeezed(), n_pred, tile), lambda n, j: (n, 0, j)),
                pl.BlockSpec((pl.Squeezed(), n_gt, tile), lambda n, j: (n, 0, j)),
                pl.BlockSpec((pl.Squeezed(), 1, tile), lambda n, j: (n, 0, j)),
            ],
            out_specs=pl.BlockSpec((1, 1), lambda n, j: (0, 0)),
            scratch_shapes=scratch,
        ),
        compiler_params=pltpu.CompilerParams(
            # Both axes reduce into resident VMEM accumulators -> sequential.
            # TODO(synk): v7x 2-TC split (leading "parallel" axis with per-core
            # accumulators + (2,1) partial outputs) omitted to keep the shared
            # accumulators race-free on all chips.
            dimension_semantics=("arbitrary", "arbitrary")),
    )(pred_ncl, gt_ncl, mask_n1l)
    return out[0, 0]


def _as_ncl(x):   # (N, C, H, W) -> (N, C, H*W): free reshape, no transpose, no copy
    n, c, h, w = x.shape
    return x.reshape(n, c, h * w)


def _as_n1l(x):   # (N, H, W) -> (N, 1, H*W)
    n, h, w = x.shape
    return x.reshape(n, 1, h * w)


class PSSLoss:
    """JAX/Pallas port of PSS_Loss with cls_loss='dice'."""

    def __init__(self, cls_loss="dice"):
        if cls_loss != "dice":
            # TODO(synk): dice_ohnm (data-dependent OHNM top-k/sort) and
            # wbce_orig (boolean-mask gather) have no clean static-shape Pallas
            # equivalent; only the 'dice' criterion is implemented here.
            raise NotImplementedError(cls_loss)
        self.eps = EPS

    # single-channel dice: pred/gt/mask are (N, H, W)
    def criterion(self, pred_nhw, gt_nhw, mask_nhw):
        return _fused_dice_sum(_as_n1l(pred_nhw), _as_n1l(gt_nhw),
                               _as_n1l(mask_nhw), n_main=1, with_max=False)

    # sum over channels of dice(pred[:, c], gt[:, c], mask) — one kernel call
    def get_loss(self, pred, gt, mask):
        return _fused_dice_sum(_as_ncl(pred), _as_ncl(gt), _as_n1l(mask),
                               n_main=pred.shape[1], with_max=False)

    def __call__(self, pred, gt, mask, gt_type="shrink"):
        if gt_type == "shrink":
            return self.get_loss(pred, gt, mask)
        elif gt_type == "pss":
            # fused: per-channel dice on pred vs gt[:, :4] PLUS
            # dice(max_c pred, gt[:, 4], mask) in a single HBM pass / kernel.
            return _fused_dice_sum(_as_ncl(pred), _as_ncl(gt), _as_n1l(mask),
                                   n_main=4, with_max=True)
        elif gt_type == "both":
            # channels 0..3 of pred/gt + dice(max over ALL pred channels,
            # gt[:, 4], mask), fused into one pass over the full tensors.
            pss_loss = _fused_dice_sum(_as_ncl(pred), _as_ncl(gt), _as_n1l(mask),
                                       n_main=4, with_max=True)
            shrink_loss = self.criterion(pred[:, 4, :, :], gt[:, 5, :, :], mask)
            return pss_loss, shrink_loss
        else:
            raise NotImplementedError("gt_type [%s] is not implemented" % gt_type)


if __name__ == "__main__":
    key = jax.random.PRNGKey(0)
    k1, k2, k3 = jax.random.split(key, 3)

    N, C, H, W = 2, 4, 16, 16
    # pred in (0,1) like sigmoid network output; gt and mask binary
    pred = jax.nn.sigmoid(jax.random.normal(k1, (N, C, H, W), jnp.float32))
    gt = (jax.random.uniform(k2, (N, C, H, W)) > 0.5).astype(jnp.float32)
    mask = (jax.random.uniform(k3, (N, H, W)) > 0.2).astype(jnp.float32)

    loss_fn = PSSLoss("dice")
    loss = loss_fn(pred, gt, mask, gt_type="shrink")
    loss = jax.block_until_ready(loss)

    # plain-JAX reference (mirrors PyTorch dice_loss / get_loss exactly)
    def ref_dice(p, g, m):
        inter = jnp.sum(p * g * m)
        union = jnp.sum(p * m) + jnp.sum(g * m) + EPS
        return 1.0 - 2.0 * inter / union

    ref = sum(ref_dice(pred[:, c], gt[:, c], mask) for c in range(C))
    assert abs(float(loss) - float(ref)) < 1e-4, (float(loss), float(ref))

    print("KERNEL_OK")
</pallas_src>

<mosaic_0001>
module attributes {stable_mosaic.version = 11 : i64} {
  func.func @kernel(%arg0: i32, %arg1: i32, %arg2: memref<1x4x256xf32, #tpu.memory_space<vmem>>, %arg3: memref<1x4x256xf32, #tpu.memory_space<vmem>>, %arg4: memref<1x1x256xf32, #tpu.memory_space<vmem>>, %arg5: memref<1x1xf32, #tpu.memory_space<vmem>>, %arg6: memref<4x256xf32, #tpu.memory_space<vmem>>, %arg7: memref<4x256xf32, #tpu.memory_space<vmem>>, %arg8: memref<4x256xf32, #tpu.memory_space<vmem>>) attributes {dimension_semantics = [#tpu.dimension_semantics<arbitrary>, #tpu.dimension_semantics<arbitrary>], iteration_bounds = array<i64: 2, 1>, scalar_prefetch = 0 : i64, scratch_operands = 3 : i64, tpu.core_type = #tpu.core_type<tc>, window_params = [{transform_indices = @transform_0, window_bounds = array<i64: 1, 4, 256>}, {transform_indices = @transform_1, window_bounds = array<i64: 1, 4, 256>}, {transform_indices = @transform_2, window_bounds = array<i64: 1, 1, 256>}, {pipeline_mode = #tpu.pipeline_mode<synchronous>, transform_indices = @transform_3, window_bounds = array<i64: 1, 1>}]} {
    %c0_i32 = arith.constant 0 : i32
    %0 = arith.cmpi eq, %arg0, %c0_i32 : i32
    %c0_i32_0 = arith.constant 0 : i32
    %1 = arith.cmpi eq, %arg1, %c0_i32_0 : i32
    %2 = arith.andi %0, %1 : i1
    %c1_i32 = arith.constant 1 : i32
    %3 = arith.cmpi eq, %arg0, %c1_i32 : i32
    %c0_i32_1 = arith.constant 0 : i32
    %4 = arith.cmpi eq, %arg1, %c0_i32_1 : i32
    %5 = arith.andi %3, %4 : i1
    %6 = arith.extui %2 : i1 to i32
    %c0_i32_2 = arith.constant 0 : i32
    %7 = arith.cmpi ne, %6, %c0_i32_2 : i32
    scf.if %7 {
      %cst = arith.constant 0.000000e+00 : f32
      %30 = vector.broadcast %cst : f32 to vector<4x256xf32>
      %c0_24 = arith.constant 0 : index
      %c0_25 = arith.constant 0 : index
      %31 = vector.load %arg6[%c0_24, %c0_25] : memref<4x256xf32, #tpu.memory_space<vmem>>, vector<4x256xf32>
      tpu.vector_store %arg6[%c0_24, %c0_25], %30 {strides = array<i32>} : memref<4x256xf32, #tpu.memory_space<vmem>>, vector<4x256xf32>,
      %cst_26 = arith.constant 0.000000e+00 : f32
      %32 = vector.broadcast %cst_26 : f32 to vector<4x256xf32>
      %c0_27 = arith.constant 0 : index
      %c0_28 = arith.constant 0 : index
      %33 = vector.load %arg7[%c0_27, %c0_28] : memref<4x256xf32, #tpu.memory_space<vmem>>, vector<4x256xf32>
      tpu.vector_store %arg7[%c0_27, %c0_28], %32 {strides = array<i32>} : memref<4x256xf32, #tpu.memory_space<vmem>>, vector<4x256xf32>,
      %cst_29 = arith.constant 0.000000e+00 : f32
      %34 = vector.broadcast %cst_29 : f32 to vector<4x256xf32>
      %c0_30 = arith.constant 0 : index
      %c0_31 = arith.constant 0 : index
      %35 = vector.load %arg8[%c0_30, %c0_31] : memref<4x256xf32, #tpu.memory_space<vmem>>, vector<4x256xf32>
      tpu.vector_store %arg8[%c0_30, %c0_31], %34 {strides = array<i32>} : memref<4x256xf32, #tpu.memory_space<vmem>>, vector<4x256xf32>,
    } else {
    }
    %c0 = arith.constant 0 : index
    %c0_3 = arith.constant 0 : index
    %c0_4 = arith.constant 0 : index
    %8 = vector.load %arg2[%c0, %c0_3, %c0_4] : memref<1x4x256xf32, #tpu.memory_space<vmem>>, vector<1x4x256xf32>
    %9 = vector.shape_cast %8 : vector<1x4x256xf32> to vector<4x256xf32>
    %c0_5 = arith.constant 0 : index
    %c0_6 = arith.constant 0 : index
    %c0_7 = arith.constant 0 : index
    %10 = vector.load %arg3[%c0_5, %c0_6, %c0_7] : memref<1x4x256xf32, #tpu.memory_space<vmem>>, vector<1x4x256xf32>
    %11 = vector.shape_cast %10 : vector<1x4x256xf32> to vector<4x256xf32>
    %c0_8 = arith.constant 0 : index
    %c0_9 = arith.constant 0 : index
    %c0_10 = arith.constant 0 : index
    %12 = vector.load %arg4[%c0_8, %c0_9, %c0_10] : memref<1x1x256xf32, #tpu.memory_space<vmem>>, vector<1x1x256xf32>
    %13 = vector.shape_cast %12 : vector<1x1x256xf32> to vector<1x256xf32>
    %14 = vector.broadcast %13 : vector<1x256xf32> to vector<4x256xf32>
    %15 = arith.mulf %11, %14 : vector<4x256xf32>
    %c0_11 = arith.constant 0 : index
    %c0_12 = arith.constant 0 : index
    %16 = vector.load %arg6[%c0_11, %c0_12] : memref<4x256xf32, #tpu.memory_space<vmem>>, vector<4x256xf32>
    %17 = arith.mulf %9, %15 : vector<4x256xf32>
    %18 = arith.addf %16, %17 : vector<4x256xf32>
    %c0_13 = arith.constant 0 : index
    %c0_14 = arith.constant 0 : index
    %19 = vector.load %arg6[%c0_13, %c0_14] : memref<4x256xf32, #tpu.memory_space<vmem>>, vector<4x256xf32>
    tpu.vector_store %arg6[%c0_13, %c0_14], %18 {strides = array<i32>} : memref<4x256xf32, #tpu.memory_space<vmem>>, vector<4x256xf32>,
    %c0_15 = arith.constant 0 : index
    %c0_16 = arith.constant 0 : index
    %20 = vector.load %arg7[%c0_15, %c0_16] : memref<4x256xf32, #tpu.memory_space<vmem>>, vector<4x256xf32>
    %21 = vector.broadcast %13 : vector<1x256xf32> to vector<4x256xf32>
    %22 = arith.mulf %9, %21 : vector<4x256xf32>
    %23 = arith.addf %20, %22 : vector<4x256xf32>
    %c0_17 = arith.constant 0 : index
    %c0_18 = arith.constant 0 : index
    %24 = vector.load %arg7[%c0_17, %c0_18] : memref<4x256xf32, #tpu.memory_space<vmem>>, vector<4x256xf32>
    tpu.vector_store %arg7[%c0_17, %c0_18], %23 {strides = array<i32>} : memref<4x256xf32, #tpu.memory_space<vmem>>, vector<4x256xf32>,
    %c0_19 = arith.constant 0 : index
    %c0_20 = arith.constant 0 : index
    %25 = vector.load %arg8[%c0_19, %c0_20] : memref<4x256xf32, #tpu.memory_space<vmem>>, vector<4x256xf32>
    %26 = arith.addf %25, %15 : vector<4x256xf32>
    %c0_21 = arith.constant 0 : index
    %c0_22 = arith.constant 0 : index
    %27 = vector.load %arg8[%c0_21, %c0_22] : memref<4x256xf32, #tpu.memory_space<vmem>>, vector<4x256xf32>
    tpu.vector_store %arg8[%c0_21, %c0_22], %26 {strides = array<i32>} : memref<4x256xf32, #tpu.memory_space<vmem>>, vector<4x256xf32>,
    %28 = arith.extui %5 : i1 to i32
    %c0_i32_23 = arith.constant 0 : i32
    %29 = arith.cmpi ne, %28, %c0_i32_23 : i32
    scf.if %29 {
      %c0_24 = arith.constant 0 : index
      %c0_25 = arith.constant 0 : index
      %30 = vector.load %arg6[%c0_24, %c0_25] : memref<4x256xf32, #tpu.memory_space<vmem>>, vector<4x256xf32>
      %cst = arith.constant dense<0.000000e+00> : vector<4xf32>
      %31 = vector.multi_reduction <add>, %30, %cst [1] : vector<4x256xf32> to vector<4xf32>
      %32 = vector.shape_cast %31 : vector<4xf32> to vector<4x1xf32>
      %c0_26 = arith.constant 0 : index
      %c0_27 = arith.constant 0 : index
      %33 = vector.load %arg7[%c0_26, %c0_27] : memref<4x256xf32, #tpu.memory_space<vmem>>, vector<4x256xf32>
      %cst_28 = arith.constant dense<0.000000e+00> : vector<4xf32>
      %34 = vector.multi_reduction <add>, %33, %cst_28 [1] : vector<4x256xf32> to vector<4xf32>
      %35 = vector.shape_cast %34 : vector<4xf32> to vector<4x1xf32>
      %c0_29 = arith.constant 0 : index
      %c0_30 = arith.constant 0 : index
      %36 = vector.load %arg8[%c0_29, %c0_30] : memref<4x256xf32, #tpu.memory_space<vmem>>, vector<4x256xf32>
      %cst_31 = arith.constant dense<0.000000e+00> : vector<4xf32>
      %37 = vector.multi_reduction <add>, %36, %cst_31 [1] : vector<4x256xf32> to vector<4xf32>
      %38 = vector.shape_cast %37 : vector<4xf32> to vector<4x1xf32>
      %39 = arith.addf %35, %38 : vector<4x1xf32>
      %cst_32 = arith.constant 9.99999997E-7 : f32
      %40 = vector.broadcast %cst_32 : f32 to vector<4x1xf32>
      %41 = arith.addf %39, %40 : vector<4x1xf32>
      %cst_33 = arith.constant 2.000000e+00 : f32
      %42 = vector.broadcast %cst_33 : f32 to vector<4x1xf32>
      %43 = arith.mulf %42, %32 : vector<4x1xf32>
      %44 = arith.divf %43, %41 : vector<4x1xf32>
      %cst_34 = arith.constant 1.000000e+00 : f32
      %45 = vector.broadcast %cst_34 : f32 to vector<4x1xf32>
      %46 = arith.subf %45, %44 : vector<4x1xf32>
      %47 = vector.shape_cast %46 : vector<4x1xf32> to vector<1x4x1xf32>
      %cst_35 = arith.constant dense<0.000000e+00> : vector<1xf32>
      %48 = vector.multi_reduction <add>, %47, %cst_35 [1, 2] : vector<1x4x1xf32> to vector<1xf32>
      %49 = vector.shape_cast %48 : vector<1xf32> to vector<1x1x1xf32>
      %50 = vector.extract %49[0, 0, 0] : f32 from vector<1x1x1xf32>
      %51 = vector.broadcast %50 : f32 to vector<1x1xf32>
      %c0_36 = arith.constant 0 : index
      %c0_37 = arith.constant 0 : index
      %52 = vector.load %arg5[%c0_36, %c0_37] : memref<1x1xf32, #tpu.memory_space<vmem>>, vector<1x1xf32>
      tpu.vector_store %arg5[%c0_36, %c0_37], %51 {strides = array<i32>} : memref<1x1xf32, #tpu.memory_space<vmem>>, vector<1x1xf32>,
    } else {
    }
    return
  }
  func.func @transform_0(%arg0: i32, %arg1: i32) -> (i32, i32, i32) {
    %c0_i32 = arith.constant 0 : i32
    %c0_i32_0 = arith.constant 0 : i32
    return %arg0, %c0_i32, %arg1 : i32, i32, i32
  }
  func.func @transform_1(%arg0: i32, %arg1: i32) -> (i32, i32, i32) {
    %c0_i32 = arith.constant 0 : i32
    %c0_i32_0 = arith.constant 0 : i32
    return %arg0, %c0_i32, %arg1 : i32, i32, i32
  }
  func.func @transform_2(%arg0: i32, %arg1: i32) -> (i32, i32, i32) {
    %c0_i32 = arith.constant 0 : i32
    %c0_i32_0 = arith.constant 0 : i32
    return %arg0, %c0_i32, %arg1 : i32, i32, i32
  }
  func.func @transform_3(%arg0: i32, %arg1: i32) -> (i32, i32) {
    %c0_i32 = arith.constant 0 : i32
    %c0_i32_0 = arith.constant 0 : i32
    %c0_i32_1 = arith.constant 0 : i32
    return %c0_i32, %c0_i32_0 : i32, i32
  }
}

</mosaic_0001>

<llo_original>
// kernel: tpu_custom_call.1
$region0: #{tpu_custom_call.1}
  #allocation0 [shape = 'u32[]', space=smem, size = 0x4, offset = 0x4, fixed_abs, tag = 'smem constant byte address 0x4 - core index']
  #allocation1 [shape = 'u32[144,128]{1,0:T(1,128)}', space=vmem, size = 0x12000, scoped, tag = 'internal scratch']
  #allocation2 [shape = 'f32[4,256]{1,0:T(4,128)}', space=vmem, size = 0x1000, scoped, tag = 'scratch operand']
  #allocation3 [shape = 'f32[4,256]{1,0:T(4,128)}', space=vmem, size = 0x1000, scoped, tag = 'scratch operand']
  #allocation4 [shape = 'f32[4,256]{1,0:T(4,128)}', space=vmem, size = 0x1000, scoped, tag = 'scratch operand']
  %s0 = inlined_call_operand.hbm [shape: f32[2,4,256], index: 0, kind: input, shape index: {}]
  %s1 = inlined_call_operand.hbm [shape: f32[2,4,256], index: 1, kind: input, shape index: {}]
  %s2 = inlined_call_operand.vmem [shape: f32[2,1,256], index: 2, kind: input, shape index: {}]
  %s3 = inlined_call_operand.hbm [shape: f32[1,1], index: 3, kind: output, shape index: {}]
  %s4 = sld [smem:[#allocation0]]
  $region61: #{tpu_custom_call.1} parent=0
    _
  %s6 = ssub.s32 1, %s4
  %s7 = scalar_select 0, %s6, %s4
  $region1: #{tpu_custom_call.1} parent=0
    #allocation5 [shape = 'u8[8192]{0}', space=vmem, size = 0x2000, scoped, tag = 'input window, operand 0']
    #allocation6 [shape = 's32[2]{0}', space=sflag, size = 0x8, scoped, tag = 'scoped memory for tpu_custom_call.1']
    #allocation7 [shape = 's32[2]{0}', space=sflag, size = 0x8, scoped, tag = 'scoped memory for tpu_custom_call.1']
    #allocation8 [shape = 'u8[8192]{0}', space=vmem, size = 0x2000, scoped, tag = 'input window, operand 1']
    #allocation9 [shape = 's32[2]{0}', space=sflag, size = 0x8, scoped, tag = 'scoped memory for tpu_custom_call.1']
    #allocation10 [shape = 'u8[512]{0}', space=vmem, size = 0x400, scoped, tag = 'output window, operand 0, single buffered']
    %8 = vsyncpa [#allocation6], 0
    %s9 = scalar_lea.sflag [#allocation6], 1
    %10 = vsyncpa %s9, 0
    %11 = vsyncpa [#allocation9], 0
    %s12 = scalar_lea.sflag [#allocation9], 1
    %13 = vsyncpa %s12, 0
    %14 = vsyncpa [#allocation7], 0
    loop: start=0, step=1, limit=4
    $region2: #{tpu_custom_call.1} parent=1 // loop_pre_header
      _
    $region3: #{tpu_custom_call.1} parent=1 // loop_header
      %s16 = sphi 0, %s20
      %p17 = scmp.ge.s32.totalorder %s16, 4
      %s23 = sphi 0, %s35
      %s24 = sphi 0, %s31
      %s25 = sphi 0, %s23
      %s26 = sphi 0, %s24
      %s27 = sphi 0, %s25
      %s28 = sphi 0, %s26
      %s40 = sphi 0, %s42
      %s43 = sphi 0, %s40
      %s44 = sphi 0, %s43
      %s60 = sphi 0, %s44
      %s68 = sphi 0, %s70
      %s71 = sphi 0, %s68
      %s72 = sphi 0, %s71
      %s88 = sphi 0, %s72
      %s96 = sphi 0, %s98
      %s99 = sphi 0, %s96
      %s100 = sphi 0, %s99
      %s116 = sphi 0, %s100
      %s120 = sphi 0, %s120
      %s122 = sphi 0, %s120
      %s123 = sphi 0, %s122
      %s137 = sphi 0, %s123
    $region4: #{tpu_custom_call.1} parent=1 // loop_header_branch
      %19 = sbr.rel (%p17) target = $region8
    $region5: #{tpu_custom_call.1} parent=1 // loop_body
      %s21 = ssub.s32 %s16, 1
      %s22 = ssub.s32 %s16, 2
      %s29 = sadd.s32 1, %s24
      %p30 = scmp.ge.s32.totalorder %s29, 1
      %s31 = scalar_select %p30, 0, %s29
      %s32 = sadd.s32 1, %s23
      %s33 = scalar_select %p30, %s32, %s23
      %p34 = scmp.ge.s32.totalorder %s33, 2
      %s35 = scalar_select %p34, 0, %s33
      %s36 = ssub.s32 %s23, %s35
      %s37 = ssub.s32 %s24, %s31
      %s38 = sor.u32 %s36, %s37
      %p39 = scmp.eq.s32.totalorder %s38, 0
      %s41 = sadd.s32 %s40, 1
      %s42 = scalar_select %p39, %s40, %s41
      %p45 = pneg %p39
      %p46 = scmp.eq.s32.totalorder %s16, 1
      %p47 = por %p45, %p46
      %p48 = scmp.ne.s32.totalorder %s40, %s43
      %p49 = scmp.eq.s32.totalorder %s16, 0
      %p50 = por %p48, %p49
      %p51 = scmp.ne.s32.totalorder %s40, %s43
      %p52 = scmp.eq.s32.totalorder %s21, 1
      %p53 = por %p51, %p52
      %p54 = scmp.ne.s32.totalorder %s43, %s44
      %p55 = scmp.eq.s32.totalorder %s21, 0
      %p56 = por %p54, %p55
      %p57 = scmp.ne.s32.totalorder %s43, %s44
      %p58 = scmp.eq.s32.totalorder %s22, 1
      %p59 = por %p57, %p58
      %p61 = scmp.ne.s32.totalorder %s44, %s60
      %p62 = scmp.eq.s32.totalorder %s22, 0
      %p63 = por %p61, %p62
      %s64 = ssub.s32 %s23, %s35
      %s65 = ssub.s32 %s24, %s31
      %s66 = sor.u32 %s64, %s65
      %p67 = scmp.eq.s32.totalorder %s66, 0
      %s69 = sadd.s32 %s68, 1
      %s70 = scalar_select %p67, %s68, %s69
      %p73 = pneg %p67
      %p74 = scmp.eq.s32.totalorder %s16, 1
      %p75 = por %p73, %p74
      %p76 = scmp.ne.s32.totalorder %s68, %s71
      %p77 = scmp.eq.s32.totalorder %s16, 0
      %p78 = por %p76, %p77
      %p79 = scmp.ne.s32.totalorder %s68, %s71
      %p80 = scmp.eq.s32.totalorder %s21, 1
      %p81 = por %p79, %p80
      %p82 = scmp.ne.s32.totalorder %s71, %s72
      %p83 = scmp.eq.s32.totalorder %s21, 0
      %p84 = por %p82, %p83
      %p85 = scmp.ne.s32.totalorder %s71, %s72
      %p86 = scmp.eq.s32.totalorder %s22, 1
      %p87 = por %p85, %p86
      %p89 = scmp.ne.s32.totalorder %s72, %s88
      %p90 = scmp.eq.s32.totalorder %s22, 0
      %p91 = por %p89, %p90
      %s92 = ssub.s32 %s23, %s35
      %s93 = ssub.s32 %s24, %s31
      %s94 = sor.u32 %s92, %s93
      %p95 = scmp.eq.s32.totalorder %s94, 0
      %s97 = sadd.s32 %s96, 1
      %s98 = scalar_select %p95, %s96, %s97
      %p101 = pneg %p95
      %p102 = scmp.eq.s32.totalorder %s16, 1
      %p103 = por %p101, %p102
      %p104 = scmp.ne.s32.totalorder %s96, %s99
      %p105 = scmp.eq.s32.totalorder %s16, 0
      %p106 = por %p104, %p105
      %p107 = scmp.ne.s32.totalorder %s96, %s99
      %p108 = scmp.eq.s32.totalorder %s21, 1
      %p109 = por %p107, %p108
      %p110 = scmp.ne.s32.totalorder %s99, %s100
      %p111 = scmp.eq.s32.totalorder %s21, 0
      %p112 = por %p110, %p111
      %p113 = scmp.ne.s32.totalorder %s99, %s100
      %p114 = scmp.eq.s32.totalorder %s22, 1
      %p115 = por %p113, %p114
      %p117 = scmp.ne.s32.totalorder %s100, %s116
      %p118 = scmp.eq.s32.totalorder %s22, 0
      %p119 = por %p117, %p118
      %s121 = sadd.s32 %s120, 1
      %p124 = scmp.eq.s32.totalorder %s16, 1
      %p125 = scmp.ne.s32.totalorder %s120, %s122
      %p126 = scmp.eq.s32.totalorder %s16, 0
      %p127 = por %p125, %p126
      %p128 = scmp.ne.s32.totalorder %s120, %s122
      %p129 = scmp.eq.s32.totalorder %s21, 1
      %p130 = por %p128, %p129
      %p131 = scmp.ne.s32.totalorder %s122, %s123
      %p132 = scmp.eq.s32.totalorder %s21, 0
      %p133 = por %p131, %p132
      %p134 = scmp.ne.s32.totalorder %s122, %s123
      %p135 = scmp.eq.s32.totalorder %s22, 1
      %p136 = por %p134, %p135
      %p138 = scmp.ne.s32.totalorder %s123, %s137
      %p139 = scmp.eq.s32.totalorder %s22, 0
      %p140 = por %p138, %p139
      %p141 = scmp.le.s32.totalorder 1, %s16
      %p142 = scmp.lt.s32.totalorder %s16, 3
      %p143 = pnand %p141, %p142
      %p144 = pneg %p143
      // Predicated region
      $region9: #{tpu_custom_call.1} parent=5 // pred_check
        _
      $region10: #{tpu_custom_call.1} parent=5 // pred_check_branch
        %146 = sbr.rel (%p143) target = $region12
      $region11: #{tpu_custom_call.1} parent=5 // pred_region
        %s147 = ssub.s32 %s16, 1
      $region12: #{tpu_custom_call.1} parent=5 // pred_fallthru
        _
      %p148 = scmp.lt.s32.totalorder %s16, 2
      // Predicated region
      $region13: #{tpu_custom_call.1} parent=5 // pred_check
        %p149 = pneg %p148
      $region14: #{tpu_custom_call.1} parent=5 // pred_check_branch
        %151 = sbr.rel (%p149) target = $region16
      $region15: #{tpu_custom_call.1} parent=5 // pred_region
        // Predicated region
        $region17: #{tpu_custom_call.1} parent=15 // pred_check
          %p152 = pneg %p50
        $region18: #{tpu_custom_call.1} parent=15 // pred_check_branch
          %154 = sbr.rel (%p152) target = $region20
        $region19: #{tpu_custom_call.1} parent=15 // pred_region
          %s155 = sand.u32 %s40, 1
          %s156 = scalar_lea.sflag [#allocation6], %s155
          %s157 = sand.u32 %s40, 1
          %s158 = smul.addr %s157, 8
          %s159 = scalar_lea.vmem [#allocation5], %s158
          %s160 = smul.u32 2, %s24
          %s162 = ssub.s32 128, 128
          %163 = vsyncadd %s156, %s162
          %s164 = smul.addr %s23, 2
          %s165 = sadd.s32 %s160, %s164
          %s166 = smul.addr %s165, 64
          %s167 = scalar_lea.hbm %s0, %s166
          %s169 = sshll.u32 %s159, 4
          %s170 = int_to_ptr.vmem [resolvable:$true] %s169
          %172 = dma.hbm_to_vmem [thread:$0]  %s167, 128, %s170, %s156
        $region20: #{tpu_custom_call.1} parent=15 // pred_fallthru
          _
        // Predicated region
        $region21: #{tpu_custom_call.1} parent=15 // pred_check
          %p173 = pneg %p78
        $region22: #{tpu_custom_call.1} parent=15 // pred_check_branch
          %175 = sbr.rel (%p173) target = $region24
        $region23: #{tpu_custom_call.1} parent=15 // pred_region
          %s176 = sand.u32 %s68, 1
          %s177 = scalar_lea.sflag [#allocation9], %s176
          %s178 = sand.u32 %s68, 1
          %s179 = smul.addr %s178, 8
          %s180 = scalar_lea.vmem [#allocation8], %s179
          %s181 = smul.u32 2, %s24
          %s183 = ssub.s32 128, 128
          %184 = vsyncadd %s177, %s183
          %s185 = smul.addr %s23, 2
          %s186 = sadd.s32 %s181, %s185
          %s187 = smul.addr %s186, 64
          %s188 = scalar_lea.hbm %s1, %s187
          %s190 = sshll.u32 %s180, 4
          %s191 = int_to_ptr.vmem [resolvable:$true] %s190
          %193 = dma.hbm_to_vmem [thread:$0]  %s188, 128, %s191, %s177
        $region24: #{tpu_custom_call.1} parent=15 // pred_fallthru
          _
        // Predicated region
        $region25: #{tpu_custom_call.1} parent=15 // pred_check
          %p194 = pneg %p106
        $region26: #{tpu_custom_call.1} parent=15 // pred_check_branch
          %196 = sbr.rel (%p194) target = $region28
        $region27: #{tpu_custom_call.1} parent=15 // pred_region
          %s197 = smul.u32 2, %s24
          %p198 = scmp.lt.s32.totalorder %s23, 1
          %s199 = scalar_select %p198, %s23, 1
          %p200 = scmp.lt.s32.totalorder %s197, 1
          %s201 = scalar_select %p200, %s197, 1
          %s202 = smul.addr %s199, 2
          %s203 = sadd.s32 %s201, %s202
          %s204 = scalar_lea.vmem %s2, %s203
          %s205 = smul.u32 2, %s24
        $region28: #{tpu_custom_call.1} parent=15 // pred_fallthru
          _
      $region16: #{tpu_custom_call.1} parent=5 // pred_fallthru
        _
      %p206 = scmp.le.s32.totalorder 1, %s16
      %p207 = scmp.lt.s32.totalorder %s16, 3
      %p208 = pnand %p206, %p207
      %p209 = pneg %p208
      // Predicated region
      $region29: #{tpu_custom_call.1} parent=5 // pred_check
        _
      $region30: #{tpu_custom_call.1} parent=5 // pred_check_branch
        %211 = sbr.rel (%p208) target = $region32
      $region31: #{tpu_custom_call.1} parent=5 // pred_region
        %s212 = ssub.s32 %s16, 1
        %s213 = sand.u32 %s43, 1
        %s214 = scalar_lea.sflag [#allocation6], %s213
        %s215 = sand.u32 %s43, 1
        %s216 = smul.addr %s215, 8
        %s217 = scalar_lea.vmem [#allocation5], %s216
        // Predicated region
        $region33: #{tpu_custom_call.1} parent=31 // pred_check
          %p218 = pneg %p56
        $region34: #{tpu_custom_call.1} parent=31 // pred_check_branch
          %220 = sbr.rel (%p218) target = $region36
        $region35: #{tpu_custom_call.1} parent=31 // pred_region
          %221 = dma.done %s214, 128
        $region36: #{tpu_custom_call.1} parent=31 // pred_fallthru
          _
        %s222 = sand.u32 %s71, 1
        %s223 = scalar_lea.sflag [#allocation9], %s222
        %s224 = sand.u32 %s71, 1
        %s225 = smul.addr %s224, 8
        %s226 = scalar_lea.vmem [#allocation8], %s225
        // Predicated region
        $region37: #{tpu_custom_call.1} parent=31 // pred_check
          %p227 = pneg %p84
        $region38: #{tpu_custom_call.1} parent=31 // pred_check_branch
          %229 = sbr.rel (%p227) target = $region40
        $region39: #{tpu_custom_call.1} parent=31 // pred_region
          %230 = dma.done %s223, 128
        $region40: #{tpu_custom_call.1} parent=31 // pred_fallthru
          _
        %s231 = sand.u32 %s43, 1
        %s232 = scalar_lea.sflag [#allocation6], %s231
        %s233 = sand.u32 %s43, 1
        %s234 = smul.addr %s233, 8
        %s235 = scalar_lea.vmem [#allocation5], %s234
        %p236 = pneg %p56
        %p237 = pneg %p53
        %s238 = sand.u32 %s71, 1
        %s239 = scalar_lea.sflag [#allocation9], %s238
        %s240 = sand.u32 %s71, 1
        %s241 = smul.addr %s240, 8
        %s242 = scalar_lea.vmem [#allocation8], %s241
        %p243 = pneg %p84
        %p244 = pneg %p81
        %s245 = smul.u32 2, %s26
        %p246 = scmp.lt.s32.totalorder %s25, 1
        %s247 = scalar_select %p246, %s25, 1
        %p248 = scmp.lt.s32.totalorder %s245, 1
        %s249 = scalar_select %p248, %s245, 1
        %s250 = smul.addr %s247, 2
        %s251 = sadd.s32 %s249, %s250
        %s252 = scalar_lea.vmem %s2, %s251
        %p253 = pneg %p112
        %p254 = pneg %p109
        %p255 = pneg %p133
        %p256 = pneg %p130
        %s257 = smul.u32 2, %s26
        %s258 = smul.u32 2, %s26
        %s259 = smul.u32 2, %s26
        %p260 = scmp.lt.s32.totalorder %s25, 1
        %s261 = scalar_select %p260, %s25, 1
        %p262 = scmp.lt.s32.totalorder %s259, 1
        %s263 = scalar_select %p262, %s259, 1
        %s264 = smul.addr %s261, 2
        %s265 = sadd.s32 %s263, %s264
        %s266 = scalar_lea.vmem %s2, %s265
        %s267 = smul.u32 2, %s26
        %p268 = scmp.eq.s32.totalorder %s25, 0
        %p269 = scmp.eq.s32.totalorder %s26, 0
        %p270 = pnand %p268, %p269
        %p271 = pneg %p270
        %p272 = scmp.eq.s32.totalorder %s25, 1
        %p273 = pnand %p272, %p269
        %p274 = pneg %p273
        // Predicated region
        $region41: #{tpu_custom_call.1} parent=31 // pred_check
          _
        $region42: #{tpu_custom_call.1} parent=31 // pred_check_branch
          %276 = sbr.rel (%p270) target = $region44
        $region43: #{tpu_custom_call.1} parent=31 // pred_region
          %277 = vst [vmem:[#allocation2] sm:$0xff] 0.0
          %278 = vst [vmem:[#allocation3] sm:$0xff] 0.0
          %279 = vst [vmem:[#allocation4] sm:$0xff] 0.0
        $region44: #{tpu_custom_call.1} parent=31 // pred_fallthru
          _
        %v280 = vld [vmem:[%s217] sm:$0xff]
        %v281 = vld [vmem:[%s226] sm:$0xff]
        %v282 = vld [vmem:[%s266] sm:$0x3]
        %v284 = vlaneseq
        %v285 = vshrl.u32 %v284, 7
        %v286 = vsub.s32 0, %v285
        %v287 = vrot.slane %v282, %v286
        %v288 = vlaneseq
        %v289 = vshrl.u32 %v288, 7
        %v290 = vsub.s32 1, %v289
        %v291 = vrot.slane %v282, %v290
        %v292 = vcombine.low %v287, %v291
        %v294 = vmul.f32 %v281, %v292
        %v295 = vld [vmem:[#allocation2] sm:$0xff]
        %v296 = vmul.f32 %v280, %v294
        %v297 = vadd.f32 %v295, %v296
        %298 = vst [vmem:[#allocation2] sm:$0xff] %v297
        %v299 = vld [vmem:[#allocation3] sm:$0xff]
        %v300 = vmul.f32 %v280, %v292
        %v301 = vadd.f32 %v299, %v300
        %302 = vst [vmem:[#allocation3] sm:$0xff] %v301
        %v303 = vld [vmem:[#allocation4] sm:$0xff]
        %v304 = vadd.f32 %v303, %v294
        %305 = vst [vmem:[#allocation4] sm:$0xff] %v304
        // Predicated region
        $region45: #{tpu_custom_call.1} parent=31 // pred_check
          _
        $region46: #{tpu_custom_call.1} parent=31 // pred_check_branch
          %307 = sbr.rel (%p273) target = $region48
        $region47: #{tpu_custom_call.1} parent=31 // pred_region
          %v308 = vld [vmem:[#allocation2] sm:$0xff]
          %v310 = vcombine.high %v308, %v308
          %vm312 = vcmask 1043456
          %v313 = vsel %vm312, %v308, 0.0
          %v314 = vsel %vm312, %v310, 0.0
          %v315 = vadd.f32 %v313, %v314
          %316 = vadd.xlane.f32.xlu0 %v315
          %v317 = vpop.xlane.xlu0 %316
          %v318 = vld [vmem:[#allocation3] sm:$0xff]
          %v320 = vcombine.high %v318, %v318
          %v322 = vsel %vm312, %v318, 0.0
          %v323 = vsel %vm312, %v320, 0.0
          %v324 = vadd.f32 %v322, %v323
          %325 = vadd.xlane.f32.xlu0 %v324
          %v326 = vpop.xlane.xlu0 %325
          %v327 = vld [vmem:[#allocation4] sm:$0xff]
          %v329 = vcombine.high %v327, %v327
          %v331 = vsel %vm312, %v327, 0.0
          %v332 = vsel %vm312, %v329, 0.0
          %v333 = vadd.f32 %v331, %v332
          %334 = vadd.xlane.f32.xlu0 %v333
          %v335 = vpop.xlane.xlu0 %334
          %v336 = vadd.f32 %v326, %v335
          %v337 = vadd.f32 %v336, 1e-06
          %v338 = vmul.f32 %v317, 2.0
          %v339 = vrcp.pop %v337
          %v340 = vmul.f32 %v338, %v339
          %v341 = vsub.f32 1.0, %v340
          %vm342 = vcmask 3072
          %v343 = vsel %vm342, %v341, 0.0
          %344 = vadd.xlane.f32.xlu0 %v343
          %v345 = vpop.xlane.xlu0 %344
          %v346 = vrot.slane %v345, 4
          %v347 = vadd.f32 %v345, %v346
          %v348 = vrot.slane %v347, 2
          %v349 = vadd.f32 %v347, %v348
          %v350 = vrot.slane %v349, 1
          %v351 = vadd.f32 %v349, %v350
          %s352 = vtos %v351
          %v353 = vstv %s352
          %vm354 = vcmask 0
          %355 = vst.msk [vmem:[#allocation10] sm:$0x1] %vm354, %v353
        $region48: #{tpu_custom_call.1} parent=31 // pred_fallthru
          _
        // Predicated region
        $region49: #{tpu_custom_call.1} parent=31 // pred_check
          %p356 = pneg %p130
        $region50: #{tpu_custom_call.1} parent=31 // pred_check_branch
          %358 = sbr.rel (%p356) target = $region52
        $region51: #{tpu_custom_call.1} parent=31 // pred_region
          %s360 = ssub.s32 16, 16
          %361 = vsyncadd [#allocation7], %s360
          %s363 = sshll.u32 [#allocation10], 4
          %s364 = int_to_ptr.vmem [resolvable:$true] %s363
          %366 = dma.vmem_to_hbm [thread:$0]  %s364, 16, %s3, [#allocation7]
        $region52: #{tpu_custom_call.1} parent=31 // pred_fallthru
          _
        // Predicated region
        $region53: #{tpu_custom_call.1} parent=31 // pred_check
          %p367 = pneg %p130
        $region54: #{tpu_custom_call.1} parent=31 // pred_check_branch
          %369 = sbr.rel (%p367) target = $region56
        $region55: #{tpu_custom_call.1} parent=31 // pred_region
          %370 = dma.done [#allocation7], 16
        $region56: #{tpu_custom_call.1} parent=31 // pred_fallthru
          _
      $region32: #{tpu_custom_call.1} parent=5 // pred_fallthru
        _
      %p371 = scmp.le.s32.totalorder 2, %s16
      // Predicated region
      $region57: #{tpu_custom_call.1} parent=5 // pred_check
        %p372 = pneg %p371
      $region58: #{tpu_custom_call.1} parent=5 // pred_check_branch
        %374 = sbr.rel (%p372) target = $region60
      $region59: #{tpu_custom_call.1} parent=5 // pred_region
        %s375 = ssub.s32 %s16, 2
      $region60: #{tpu_custom_call.1} parent=5 // pred_fallthru
        _
    $region6: #{tpu_custom_call.1} parent=1 // loop_footer
      %s20 = sadd.s32 1, %s16
    $region7: #{tpu_custom_call.1} parent=1 // loop_footer_branch
      %15 = sbr.rel target = $region3
    $region8: #{tpu_custom_call.1} parent=1 // loop_exit
      _
    %376 = vsyncpa [#allocation6], 1
    %s377 = scalar_lea.sflag [#allocation6], 1
    %378 = vsyncpa %s377, 1
    %379 = vsyncpa [#allocation9], 1
    %s380 = scalar_lea.sflag [#allocation9], 1
    %381 = vsyncpa %s380, 1
    %382 = vsyncpa [#allocation7], 1
    %s383 = scalar_lea.sflag [#allocation7], 1
    %384 = vsyncpa %s383, 1

</llo_original>
